<compile_context>
chip_gen: v7x
topology: tpu7x:2x2x1
jax: 0.10.0
libtpu: 0.0.40
codegen_flags: <defaults>
</compile_context>

<pallas_src>
import jax
import jax.numpy as jnp
from jax.experimental import pallas as pl
from jax.experimental.pallas import tpu as pltpu


def line_agc_kernel(x_ref, a_ref, w_ref, bias_ref, o_ref):
    # x_ref:    [T, B*M*in_dim]            folded input (128 lanes, dense)
    # a_ref:    [B*M*in_dim, B*M*in_dim]   blockdiag_b( kron(adj[b], I_in).T )
    # w_ref:    [B*M*in_dim, B*M*out_dim]  blockdiag_{b,m}( route_weights[m] )
    # bias_ref: [1, B*M*out_dim]           bias tiled across batch
    # o_ref:    [T, B*M*out_dim]           lane-dense output (1024 lanes)

    # Graph aggregation for every (batch, timestep) in ONE MXU matmul:
    #   h[t, (b,m,d)] = sum_n adj[b,m,n] * x[b,t,n,d]
    h = jnp.dot(x_ref[...], a_ref[...], preferred_element_type=jnp.float32)

    # Per-route linear for every (batch, timestep) in ONE block-diagonal matmul:
    #   ht[t, (b,m,l)] = sum_d h[t,(b,m,d)] * W[m,d,l]
    ht = jnp.dot(h.astype(w_ref.dtype), w_ref[...],
                 preferred_element_type=jnp.float32)

    o_ref[...] = jnp.maximum(ht + bias_ref[...].astype(jnp.float32),
                             0.0).astype(o_ref.dtype)


def prepare_line_agc_params(route_weights, route_bias, batch_size):
    """Parameter-only layout plumbing, hoisted OUT of the forward path.

    Build once at init / parameter update; reuse across forwards.
      w_fold:    [B*M*in_dim, B*M*out_dim]  block-diagonal over (batch, route)
      bias_fold: [1, B*M*out_dim]
    """
    M, in_dim, out_dim = route_weights.shape
    MI, MO = M * in_dim, M * out_dim
    # Block-diag over routes: w_bd[m*in+d, k*out+l] = W[m,d,l] * (m==k)
    eye_m = jnp.eye(M, dtype=route_weights.dtype)
    w_bd = jnp.einsum('mdl,mk->mdkl', route_weights, eye_m).reshape(MI, MO)
    # Replicate over batch as a block-diagonal (weights are shared across b).
    w_fold = jnp.kron(jnp.eye(batch_size, dtype=w_bd.dtype), w_bd)
    # Bias tiled across batch in (b, m, l) lane order.
    bias_fold = jnp.tile(route_bias.reshape(1, MO), (1, batch_size))
    return w_fold, bias_fold


def line_agc(x, adj, w_fold, bias_fold):
    """x: [B,T,M,in_dim], adj: [B,M,M] -> [B,T,M,out_dim].

    Single kernel invocation: at these sizes everything fits VMEM easily
    (x 4 KiB, A 64 KiB, W 512 KiB, out 32 KiB) and every operand / the output
    is a lane-dense multiple of 128.
    """
    B, T, M, in_dim = x.shape
    MI = M * in_dim
    BMI = B * MI
    BMO = w_fold.shape[1]
    out_dim = BMO // (B * M)

    # ---- per-forward layout plumbing (depends only on x / adj) ----
    # Folded input: x_fold[t, b*MI + n*in + d] = x[b, t, n, d]
    x_fold = jnp.transpose(x, (1, 0, 2, 3)).reshape(T, BMI)
    # Folded adjacency: blockdiag over b of kron(adj[b], I_in).T
    #   a_fold[b*MI + n*in + e, c*MI + m*in + d] = adj[b,m,n] * (e==d) * (b==c)
    eye_in = jnp.eye(in_dim, dtype=adj.dtype)
    eye_b = jnp.eye(B, dtype=adj.dtype)
    a_fold = jnp.einsum('bmn,ed,bc->bnecmd', adj, eye_in, eye_b).reshape(BMI, BMI)
    # TODO(synk): at realistic M*in_dim, replace the kron-folded adjacency with
    # a per-batch adj @ x matmul plus an in-kernel XLU reshuffle, and add a
    # K-tiled grid axis ("arbitrary") with pl.Buffered(1) constant-weight
    # blocks so the resident [MI,MI]/[MI,MO] blocks fit v7x's 64 MiB VMEM.

    out_fold = pl.pallas_call(
        line_agc_kernel,
        out_shape=jax.ShapeDtypeStruct((T, BMO), x.dtype),
        in_specs=[
            pl.BlockSpec(memory_space=pltpu.MemorySpace.VMEM),  # x_fold
            pl.BlockSpec(memory_space=pltpu.MemorySpace.VMEM),  # a_fold
            pl.BlockSpec(memory_space=pltpu.MemorySpace.VMEM),  # w_fold
            pl.BlockSpec(memory_space=pltpu.MemorySpace.VMEM),  # bias_fold
        ],
        out_specs=pl.BlockSpec(memory_space=pltpu.MemorySpace.VMEM),
        compiler_params=pltpu.CompilerParams(
            vmem_limit_bytes=32 * 1024 * 1024),
    )(x_fold, a_fold, w_fold, bias_fold)

    # Unfold: out_fold[t, b*MO + m*out + l] -> [B, T, M, out_dim]
    out = out_fold.reshape(T, B, M, out_dim)
    return jnp.transpose(out, (1, 0, 2, 3))


def line_agc_ref(x, adj, route_weights, route_bias):
    """Pure-JAX reference mirroring the PyTorch forward."""
    B, T, M, _ = x.shape
    x_r = x.reshape(B * T, M, -1)
    adj_e = jnp.repeat(adj, T, axis=0)                       # repeat_interleave dim 0
    h = jnp.einsum('bmn,bnd->bmd', adj_e, x_r)               # bmm
    h_trans = jnp.einsum('bmd,mdl->bml', h, route_weights)
    h_out = jax.nn.relu(h_trans + route_bias)
    return h_out.reshape(B, T, M, -1)


if __name__ == "__main__":
    B, T, M, in_dim, out_dim = 2, 8, 16, 4, 32

    key = jax.random.PRNGKey(0)
    k_x, k_adj, k_w, k_b = jax.random.split(key, 4)

    x = jax.random.normal(k_x, (B, T, M, in_dim), dtype=jnp.float32)
    adj = jax.random.normal(k_adj, (B, M, M), dtype=jnp.float32)

    # Parameters (match torch.randn shapes in __init__)
    route_weights = jax.random.normal(k_w, (M, in_dim, out_dim), dtype=jnp.float32)
    route_bias = jax.random.normal(k_b, (1, M, out_dim), dtype=jnp.float32)

    # Parameter-only folds built ONCE (hoisted out of the forward path).
    w_fold, bias_fold = prepare_line_agc_params(route_weights, route_bias, B)

    forward = jax.jit(line_agc)
    out = jax.block_until_ready(forward(x, adj, w_fold, bias_fold))

    ref = line_agc_ref(x, adj, route_weights, route_bias)
    assert out.shape == (B, T, M, out_dim)
    assert jnp.allclose(out, ref, atol=1e-4, rtol=1e-4), "mismatch vs reference"

    print("KERNEL_OK")
</pallas_src>

<mosaic_0001>
module attributes {stable_mosaic.version = 11 : i64} {
  func.func @line_agc_kernel(%arg0: memref<8x128xf32, #tpu.memory_space<vmem>>, %arg1: memref<128x128xf32, #tpu.memory_space<vmem>>, %arg2: memref<128x1024xf32, #tpu.memory_space<vmem>>, %arg3: memref<1x1024xf32, #tpu.memory_space<vmem>>, %arg4: memref<8x1024xf32, #tpu.memory_space<vmem>>) attributes {dimension_semantics = [], scalar_prefetch = 0 : i64, scratch_operands = 0 : i64, tpu.core_type = #tpu.core_type<tc>} {
    %c0 = arith.constant 0 : index
    %c0_0 = arith.constant 0 : index
    %0 = vector.load %arg0[%c0, %c0_0] : memref<8x128xf32, #tpu.memory_space<vmem>>, vector<8x128xf32>
    %c0_1 = arith.constant 0 : index
    %c0_2 = arith.constant 0 : index
    %1 = vector.load %arg1[%c0_1, %c0_2] : memref<128x128xf32, #tpu.memory_space<vmem>>, vector<128x128xf32>
    %cst = arith.constant dense<0.000000e+00> : vector<8x128xf32>
    %2 = tpu.matmul %0, %1, %cst {dimension_numbers = #tpu.dot_dimension_numbers<[1], [0], [0], [1], [0, 0, 1, 1], [], []>} : vector<8x128xf32>, vector<128x128xf32>, vector<8x128xf32> -> vector<8x128xf32>
    %c0_3 = arith.constant 0 : index
    %c0_4 = arith.constant 0 : index
    %3 = vector.load %arg2[%c0_3, %c0_4] : memref<128x1024xf32, #tpu.memory_space<vmem>>, vector<128x1024xf32>
    %cst_5 = arith.constant dense<0.000000e+00> : vector<8x1024xf32>
    %4 = tpu.matmul %2, %3, %cst_5 {dimension_numbers = #tpu.dot_dimension_numbers<[1], [0], [0], [1], [0, 0, 1, 1], [], []>} : vector<8x128xf32>, vector<128x1024xf32>, vector<8x1024xf32> -> vector<8x1024xf32>
    %c0_6 = arith.constant 0 : index
    %c0_7 = arith.constant 0 : index
    %5 = vector.load %arg3[%c0_6, %c0_7] : memref<1x1024xf32, #tpu.memory_space<vmem>>, vector<1x1024xf32>
    %6 = vector.broadcast %5 : vector<1x1024xf32> to vector<8x1024xf32>
    %7 = arith.addf %4, %6 : vector<8x1024xf32>
    %cst_8 = arith.constant 0.000000e+00 : f32
    %8 = vector.broadcast %cst_8 : f32 to vector<8x1024xf32>
    %9 = arith.maximumf %7, %8 : vector<8x1024xf32>
    %c0_9 = arith.constant 0 : index
    %c0_10 = arith.constant 0 : index
    %10 = vector.load %arg4[%c0_9, %c0_10] : memref<8x1024xf32, #tpu.memory_space<vmem>>, vector<8x1024xf32>
    tpu.vector_store %arg4[%c0_9, %c0_10], %9 {strides = array<i32>} : memref<8x1024xf32, #tpu.memory_space<vmem>>, vector<8x1024xf32>,
    return
  }
}

</mosaic_0001>

<llo_original>
// kernel: line_agc.1
$region0: #{line_agc.1}
  #allocation0 [shape = 'u32[]', space=smem, size = 0x4, offset = 0x4, fixed_abs, tag = 'smem constant byte address 0x4 - core index']
  #allocation1 [shape = 'u32[144,128]{1,0:T(1,128)}', space=vmem, size = 0x12000, scoped, tag = 'internal scratch']
  %s0 = inlined_call_operand.vmem [shape: f32[8,128], index: 0, kind: input, shape index: {}]
  %s1 = inlined_call_operand.vmem [shape: f32[128,128], index: 1, kind: input, shape index: {}]
  %s2 = inlined_call_operand.vmem [shape: f32[128,1024], index: 2, kind: input, shape index: {}]
  %s3 = inlined_call_operand.vmem [shape: f32[1,1024], index: 3, kind: input, shape index: {}]
  %s4 = inlined_call_operand.vmem [shape: f32[8,1024], index: 4, kind: output, shape index: {}]
  %s5 = sld [smem:[#allocation0]]
  $region26: #{line_agc.1} parent=0
    _
  %s7 = ssub.s32 1, %s5
  %s8 = scalar_select 0, %s7, %s5
  // Predicated region
  $region2: #{line_agc.1} parent=0 // pred_check
    _
  $region3: #{line_agc.1} parent=0 // pred_check_branch
    %10 = sbr.rel (0) target = $region5
  $region4: #{line_agc.1} parent=0 // pred_region
    _
  $region5: #{line_agc.1} parent=0 // pred_fallthru
    _
  // Predicated region
  $region6: #{line_agc.1} parent=0 // pred_check
    _
  $region7: #{line_agc.1} parent=0 // pred_check_branch
    %12 = sbr.rel (0) target = $region9
  $region8: #{line_agc.1} parent=0 // pred_region
    _
  $region9: #{line_agc.1} parent=0 // pred_fallthru
    _
  // Predicated region
  $region10: #{line_agc.1} parent=0 // pred_check
    _
  $region11: #{line_agc.1} parent=0 // pred_check_branch
    %14 = sbr.rel (0) target = $region13
  $region12: #{line_agc.1} parent=0 // pred_region
    _
  $region13: #{line_agc.1} parent=0 // pred_fallthru
    _
  // Predicated region
  $region14: #{line_agc.1} parent=0 // pred_check
    _
  $region15: #{line_agc.1} parent=0 // pred_check_branch
    %16 = sbr.rel (0) target = $region17
  $region16: #{line_agc.1} parent=0 // pred_region
    _
  $region17: #{line_agc.1} parent=0 // pred_fallthru
    _
  %v17 = vld [vmem:[%s0] sm:$0xff]
  %v18 = vld [vmem:[%s1] sm:$0xff]
  %v19 = vld [vmem:[%s1 + $0x8] sm:$0xff]
  %v20 = vld [vmem:[%s1 + $0x10] sm:$0xff]
  %v21 = vld [vmem:[%s1 + $0x18] sm:$0xff]
  %v22 = vld [vmem:[%s1 + $0x20] sm:$0xff]
  %v23 = vld [vmem:[%s1 + $0x28] sm:$0xff]
  %v24 = vld [vmem:[%s1 + $0x30] sm:$0xff]
  %v25 = vld [vmem:[%s1 + $0x38] sm:$0xff]
  %v26 = vld [vmem:[%s1 + $0x40] sm:$0xff]
  %v27 = vld [vmem:[%s1 + $0x48] sm:$0xff]
  %v28 = vld [vmem:[%s1 + $0x50] sm:$0xff]
  %v29 = vld [vmem:[%s1 + $0x58] sm:$0xff]
  %v30 = vld [vmem:[%s1 + $0x60] sm:$0xff]
  %v31 = vld [vmem:[%s1 + $0x68] sm:$0xff]
  %v32 = vld [vmem:[%s1 + $0x70] sm:$0xff]
  %v33 = vld [vmem:[%s1 + $0x78] sm:$0xff]
  %34 = vmatprep.subr.mxu0 0.0
  %35 = vmatpush1.msra.mxu0 %v18
  %36 = vmatprep.subr.mxu0 0.0
  %37 = vmatpush1.msra.mxu0 %v19
  %38 = vmatprep.subr.mxu0 0.0
  %39 = vmatpush1.msra.mxu0 %v20
  %40 = vmatprep.subr.mxu0 0.0
  %41 = vmatpush1.msra.mxu0 %v21
  %42 = vmatprep.subr.mxu0 0.0
  %43 = vmatpush1.msra.mxu0 %v22
  %44 = vmatprep.subr.mxu0 0.0
  %45 = vmatpush1.msra.mxu0 %v23
  %46 = vmatprep.subr.mxu0 0.0
  %47 = vmatpush1.msra.mxu0 %v24
  %48 = vmatprep.subr.mxu0 0.0
  %49 = vmatpush1.msra.mxu0 %v25
  %50 = vmatprep.subr.mxu0 0.0
  %51 = vmatpush1.msra.mxu0 %v26
  %52 = vmatprep.subr.mxu0 0.0
  %53 = vmatpush1.msra.mxu0 %v27
  %54 = vmatprep.subr.mxu0 0.0
  %55 = vmatpush1.msra.mxu0 %v28
  %56 = vmatprep.subr.mxu0 0.0
  %57 = vmatpush1.msra.mxu0 %v29
  %58 = vmatprep.subr.mxu0 0.0
  %59 = vmatpush1.msra.mxu0 %v30
  %60 = vmatprep.subr.mxu0 0.0
  %61 = vmatpush1.msra.mxu0 %v31
  %62 = vmatprep.subr.mxu0 0.0
  %63 = vmatpush1.msra.mxu0 %v32
  %64 = vmatprep.subr.mxu0 0.0
  %65 = vmatpush1.msra.mxu0 %v33
  %66 = vmatprep.subr.mxu0 0.0
  %67 = vmatpush1.msra.mxu0 0.0
  %68 = vmatprep.subr.mxu0 0.0
  %69 = vmatpush1.msra.mxu0 0.0
  %70 = vmatprep.subr.mxu0 0.0
  %71 = vmatpush1.msra.mxu0 0.0
  %72 = vmatprep.subr.mxu0 0.0
  %73 = vmatpush1.msra.mxu0 0.0
  %74 = vmatprep.subr.mxu0 0.0
  %75 = vmatpush1.msra.mxu0 0.0
  %76 = vmatprep.subr.mxu0 0.0
  %77 = vmatpush1.msra.mxu0 0.0
  %78 = vmatprep.subr.mxu0 0.0
  %79 = vmatpush1.msra.mxu0 0.0
  %80 = vmatprep.subr.mxu0 0.0
  %81 = vmatpush1.msra.mxu0 0.0
  %82 = vmatprep.subr.mxu0 0.0
  %83 = vmatpush1.msra.mxu0 0.0
  %84 = vmatprep.subr.mxu0 0.0
  %85 = vmatpush1.msra.mxu0 0.0
  %86 = vmatprep.subr.mxu0 0.0
  %87 = vmatpush1.msra.mxu0 0.0
  %88 = vmatprep.subr.mxu0 0.0
  %89 = vmatpush1.msra.mxu0 0.0
  %90 = vmatprep.subr.mxu0 0.0
  %91 = vmatpush1.msra.mxu0 0.0
  %92 = vmatprep.subr.mxu0 0.0
  %93 = vmatpush1.msra.mxu0 0.0
  %94 = vmatprep.subr.mxu0 0.0
  %95 = vmatpush1.msra.mxu0 0.0
  %96 = vmatprep.subr.mxu0 0.0
  %97 = vmatpush1.msra.mxu0 0.0
  %98 = vmatprep.mubr.f32.mxu0 0.0
  %99 = vmatmul.mubr.f32.gmra.mrb[0].mxu0 %v17
  %v100 = vpop.f32.mrb[0].mxu0
  %v101 = vadd.f32 0.0, %v100
  %v102 = vpop.f32.mrb[0].mxu0
  %103 = vdwg.mxu0
  %v104 = vld [vmem:[%s2] sm:$0xff]
  %v105 = vld [vmem:[%s2 + $0x8] sm:$0xff]
  %v106 = vld [vmem:[%s2 + $0x10] sm:$0xff]
  %v107 = vld [vmem:[%s2 + $0x18] sm:$0xff]
  %v108 = vld [vmem:[%s2 + $0x20] sm:$0xff]
  %v109 = vld [vmem:[%s2 + $0x28] sm:$0xff]
  %v110 = vld [vmem:[%s2 + $0x30] sm:$0xff]
  %v111 = vld [vmem:[%s2 + $0x38] sm:$0xff]
  %v112 = vld [vmem:[%s2 + $0x40] sm:$0xff]
  %v113 = vld [vmem:[%s2 + $0x48] sm:$0xff]
  %v114 = vld [vmem:[%s2 + $0x50] sm:$0xff]
  %v115 = vld [vmem:[%s2 + $0x58] sm:$0xff]
  %v116 = vld [vmem:[%s2 + $0x60] sm:$0xff]
  %v117 = vld [vmem:[%s2 + $0x68] sm:$0xff]
  %v118 = vld [vmem:[%s2 + $0x70] sm:$0xff]
  %v119 = vld [vmem:[%s2 + $0x78] sm:$0xff]
  %v120 = vld [vmem:[%s2 + $0x80] sm:$0xff]
  %v121 = vld [vmem:[%s2 + $0x88] sm:$0xff]
  %v122 = vld [vmem:[%s2 + $0x90] sm:$0xff]
  %v123 = vld [vmem:[%s2 + $0x98] sm:$0xff]
  %v124 = vld [vmem:[%s2 + $0xa0] sm:$0xff]
  %v125 = vld [vmem:[%s2 + $0xa8] sm:$0xff]
  %v126 = vld [vmem:[%s2 + $0xb0] sm:$0xff]
  %v127 = vld [vmem:[%s2 + $0xb8] sm:$0xff]
  %v128 = vld [vmem:[%s2 + $0xc0] sm:$0xff]
  %v129 = vld [vmem:[%s2 + $0xc8] sm:$0xff]
  %v130 = vld [vmem:[%s2 + $0xd0] sm:$0xff]
  %v131 = vld [vmem:[%s2 + $0xd8] sm:$0xff]
  %v132 = vld [vmem:[%s2 + $0xe0] sm:$0xff]
  %v133 = vld [vmem:[%s2 + $0xe8] sm:$0xff]
  %v134 = vld [vmem:[%s2 + $0xf0] sm:$0xff]
  %v135 = vld [vmem:[%s2 + $0xf8] sm:$0xff]
  %v136 = vld [vmem:[%s2 + $0x100] sm:$0xff]
  %v137 = vld [vmem:[%s2 + $0x108] sm:$0xff]
  %v138 = vld [vmem:[%s2 + $0x110] sm:$0xff]
  %v139 = vld [vmem:[%s2 + $0x118] sm:$0xff]
  %v140 = vld [vmem:[%s2 + $0x120] sm:$0xff]
  %v141 = vld [vmem:[%s2 + $0x128] sm:$0xff]
  %v142 = vld [vmem:[%s2 + $0x130] sm:$0xff]
  %v143 = vld [vmem:[%s2 + $0x138] sm:$0xff]
  %v144 = vld [vmem:[%s2 + $0x140] sm:$0xff]
  %v145 = vld [vmem:[%s2 + $0x148] sm:$0xff]
  %v146 = vld [vmem:[%s2 + $0x150] sm:$0xff]
  %v147 = vld [vmem:[%s2 + $0x158] sm:$0xff]
  %v148 = vld [vmem:[%s2 + $0x160] sm:$0xff]
  %v149 = vld [vmem:[%s2 + $0x168] sm:$0xff]
  %v150 = vld [vmem:[%s2 + $0x170] sm:$0xff]
  %v151 = vld [vmem:[%s2 + $0x178] sm:$0xff]
  %v152 = vld [vmem:[%s2 + $0x180] sm:$0xff]
  %v153 = vld [vmem:[%s2 + $0x188] sm:$0xff]
  %v154 = vld [vmem:[%s2 + $0x190] sm:$0xff]
  %v155 = vld [vmem:[%s2 + $0x198] sm:$0xff]
  %v156 = vld [vmem:[%s2 + $0x1a0] sm:$0xff]
  %v157 = vld [vmem:[%s2 + $0x1a8] sm:$0xff]
  %v158 = vld [vmem:[%s2 + $0x1b0] sm:$0xff]
  %v159 = vld [vmem:[%s2 + $0x1b8] sm:$0xff]
  %v160 = vld [vmem:[%s2 + $0x1c0] sm:$0xff]
  %v161 = vld [vmem:[%s2 + $0x1c8] sm:$0xff]
  %v162 = vld [vmem:[%s2 + $0x1d0] sm:$0xff]
  %v163 = vld [vmem:[%s2 + $0x1d8] sm:$0xff]
  %v164 = vld [vmem:[%s2 + $0x1e0] sm:$0xff]
  %v165 = vld [vmem:[%s2 + $0x1e8] sm:$0xff]
  %v166 = vld [vmem:[%s2 + $0x1f0] sm:$0xff]
  %v167 = vld [vmem:[%s2 + $0x1f8] sm:$0xff]
  %v168 = vld [vmem:[%s2 + $0x200] sm:$0xff]
  %v169 = vld [vmem:[%s2 + $0x208] sm:$0xff]
  %v170 = vld [vmem:[%s2 + $0x210] sm:$0xff]
  %v171 = vld [vmem:[%s2 + $0x218] sm:$0xff]
  %v172 = vld [vmem:[%s2 + $0x220] sm:$0xff]
  %v173 = vld [vmem:[%s2 + $0x228] sm:$0xff]
  %v174 = vld [vmem:[%s2 + $0x230] sm:$0xff]
  %v175 = vld [vmem:[%s2 + $0x238] sm:$0xff]
  %v176 = vld [vmem:[%s2 + $0x240] sm:$0xff]
  %v177 = vld [vmem:[%s2 + $0x248] sm:$0xff]
  %v178 = vld [vmem:[%s2 + $0x250] sm:$0xff]
  %v179 = vld [vmem:[%s2 + $0x258] sm:$0xff]
  %v180 = vld [vmem:[%s2 + $0x260] sm:$0xff]
  %v181 = vld [vmem:[%s2 + $0x268] sm:$0xff]
  %v182 = vld [vmem:[%s2 + $0x270] sm:$0xff]
  %v183 = vld [vmem:[%s2 + $0x278] sm:$0xff]
  %v184 = vld [vmem:[%s2 + $0x280] sm:$0xff]
  %v185 = vld [vmem:[%s2 + $0x288] sm:$0xff]
  %v186 = vld [vmem:[%s2 + $0x290] sm:$0xff]
  %v187 = vld [vmem:[%s2 + $0x298] sm:$0xff]
  %v188 = vld [vmem:[%s2 + $0x2a0] sm:$0xff]
  %v189 = vld [vmem:[%s2 + $0x2a8] sm:$0xff]
  %v190 = vld [vmem:[%s2 + $0x2b0] sm:$0xff]
  %v191 = vld [vmem:[%s2 + $0x2b8] sm:$0xff]
  %v192 = vld [vmem:[%s2 + $0x2c0] sm:$0xff]
  %v193 = vld [vmem:[%s2 + $0x2c8] sm:$0xff]
  %v194 = vld [vmem:[%s2 + $0x2d0] sm:$0xff]
  %v195 = vld [vmem:[%s2 + $0x2d8] sm:$0xff]
  %v196 = vld [vmem:[%s2 + $0x2e0] sm:$0xff]
  %v197 = vld [vmem:[%s2 + $0x2e8] sm:$0xff]
  %v198 = vld [vmem:[%s2 + $0x2f0] sm:$0xff]
  %v199 = vld [vmem:[%s2 + $0x2f8] sm:$0xff]
  %v200 = vld [vmem:[%s2 + $0x300] sm:$0xff]
  %v201 = vld [vmem:[%s2 + $0x308] sm:$0xff]
  %v202 = vld [vmem:[%s2 + $0x310] sm:$0xff]
  %v203 = vld [vmem:[%s2 + $0x318] sm:$0xff]
  %v204 = vld [vmem:[%s2 + $0x320] sm:$0xff]
  %v205 = vld [vmem:[%s2 + $0x328] sm:$0xff]
  %v206 = vld [vmem:[%s2 + $0x330] sm:$0xff]
  %v207 = vld [vmem:[%s2 + $0x338] sm:$0xff]
  %v208 = vld [vmem:[%s2 + $0x340] sm:$0xff]
  %v209 = vld [vmem:[%s2 + $0x348] sm:$0xff]
  %v210 = vld [vmem:[%s2 + $0x350] sm:$0xff]
  %v211 = vld [vmem:[%s2 + $0x358] sm:$0xff]
  %v212 = vld [vmem:[%s2 + $0x360] sm:$0xff]
  %v213 = vld [vmem:[%s2 + $0x368] sm:$0xff]
  %v214 = vld [vmem:[%s2 + $0x370] sm:$0xff]
  %v215 = vld [vmem:[%s2 + $0x378] sm:$0xff]
  %v216 = vld [vmem:[%s2 + $0x380] sm:$0xff]
  %v217 = vld [vmem:[%s2 + $0x388] sm:$0xff]
  %v218 = vld [vmem:[%s2 + $0x390] sm:$0xff]
  %v219 = vld [vmem:[%s2 + $0x398] sm:$0xff]
  %v220 = vld [vmem:[%s2 + $0x3a0] sm:$0xff]
  %v221 = vld [vmem:[%s2 + $0x3a8] sm:$0xff]
  %v222 = vld [vmem:[%s2 + $0x3b0] sm:$0xff]
  %v223 = vld [vmem:[%s2 + $0x3b8] sm:$0xff]
  %v224 = vld [vmem:[%s2 + $0x3c0] sm:$0xff]
  %v225 = vld [vmem:[%s2 + $0x3c8] sm:$0xff]
  %v226 = vld [vmem:[%s2 + $0x3d0] sm:$0xff]
  %v227 = vld [vmem:[%s2 + $0x3d8] sm:$0xff]
  %v228 = vld [vmem:[%s2 + $0x3e0] sm:$0xff]
  %v229 = vld [vmem:[%s2 + $0x3e8] sm:$0xff]
  %v230 = vld [vmem:[%s2 + $0x3f0] sm:$0xff]
  %v231 = vld [vmem:[%s2 + $0x3f8] sm:$0xff]
  %v232 = vld [vmem:[%s3] sm:$0xff]
  %v234 = vlaneseq
  %v235 = vshrl.u32 %v234, 7
  %v236 = vsub.s32 0, %v235
  %v237 = vrot.slane %v232, %v236
  %v238 = vlaneseq
  %v239 = vshrl.u32 %v238, 7
  %v240 = vsub.s32 1, %v239
  %v241 = vrot.slane %v232, %v240
  %v242 = vlaneseq
  %v243 = vshrl.u32 %v242, 7
  %v244 = vsub.s32 2, %v243
  %v245 = vrot.slane %v232, %v244
  %v246 = vlaneseq
  %v247 = vshrl.u32 %v246, 7
  %v248 = vsub.s32 3, %v247
  %v249 = vrot.slane %v232, %v248
  %v250 = vlaneseq
  %v251 = vshrl.u32 %v250, 7
  %v252 = vsub.s32 4, %v251
  %v253 = vrot.slane %v232, %v252
  %v254 = vlaneseq
  %v255 = vshrl.u32 %v254, 7
  %v256 = vsub.s32 5, %v255
  %v257 = vrot.slane %v232, %v256
  %v258 = vlaneseq
  %v259 = vshrl.u32 %v258, 7
  %v260 = vsub.s32 6, %v259
  %v261 = vrot.slane %v232, %v260
  %v262 = vlaneseq
  %v263 = vshrl.u32 %v262, 7
  %v264 = vsub.s32 7, %v263
  %v265 = vrot.slane %v232, %v264
  %274 = vmatprep.subr.mxu0 %v105
  %275 = vmatpush1.msra.mxu0 %v104
  %276 = vmatprep.subr.mxu0 %v113
  %277 = vmatpush1.msra.mxu0 %v112
  %278 = vmatprep.subr.mxu0 %v121
  %279 = vmatpush1.msra.mxu0 %v120
  %280 = vmatprep.subr.mxu0 %v129
  %281 = vmatpush1.msra.mxu0 %v128
  %282 = vmatprep.subr.mxu0 %v137
  %283 = vmatpush1.msra.mxu0 %v136
  %284 = vmatprep.subr.mxu0 %v145
  %285 = vmatpush1.msra.mxu0 %v144
  %286 = vmatprep.subr.mxu0 %v153
  %287 = vmatpush1.msra.mxu0 %v152
  %288 = vmatprep.subr.mxu0 %v161
  %289 = vmatpush1.msra.mxu0 %v160
  %290 = vmatprep.subr.mxu0 %v169
  %291 = vmatpush1.msra.mxu0 %v168
  %292 = vmatprep.subr.mxu0 %v177
  %293 = vmatpush1.msra.mxu0 %v176
  %294 = vmatprep.subr.mxu0 %v185
  %295 = vmatpush1.msra.mxu0 %v184
  %296 = vmatprep.subr.mxu0 %v193
  %297 = vmatpush1.msra.mxu0 %v192
  %298 = vmatprep.subr.mxu0 %v201
  %299 = vmatpush1.msra.mxu0 %v200
  %300 = vmatprep.subr.mxu0 %v209
  %301 = vmatpush1.msra.mxu0 %v208
  %302 = vmatprep.subr.mxu0 %v217
  %303 = vmatpush1.msra.mxu0 %v216
  %304 = vmatprep.subr.mxu0 %v225
  %305 = vmatpush1.msra.mxu0 %v224
  %306 = vmatprep.subr.mxu0 0.0
  %307 = vmatpush1.msra.mxu0 0.0
  %308 = vmatprep.subr.mxu0 0.0
  %309 = vmatpush1.msra.mxu0 0.0
  %310 = vmatprep.subr.mxu0 0.0
  %311 = vmatpush1.msra.mxu0 0.0
  %312 = vmatprep.subr.mxu0 0.0
  %313 = vmatpush1.msra.mxu0 0.0
  %314 = vmatprep.subr.mxu0 0.0
  %315 = vmatpush1.msra.mxu0 0.0
  %316 = vmatprep.subr.mxu0 0.0
  %317 = vmatpush1.msra.mxu0 0.0
  %318 = vmatprep.subr.mxu0 0.0
  %319 = vmatpush1.msra.mxu0 0.0
  %320 = vmatprep.subr.mxu0 0.0
  %321 = vmatpush1.msra.mxu0 0.0
  %322 = vmatprep.subr.mxu0 0.0
  %323 = vmatpush1.msra.mxu0 0.0
  %324 = vmatprep.subr.mxu0 0.0
  %325 = vmatpush1.msra.mxu0 0.0
  %326 = vmatprep.subr.mxu0 0.0
  %327 = vmatpush1.msra.mxu0 0.0
  %328 = vmatprep.subr.mxu0 0.0
  %329 = vmatpush1.msra.mxu0 0.0
  %330 = vmatprep.subr.mxu0 0.0
  %331 = vmatpush1.msra.mxu0 0.0
  %332 = vmatprep.subr.mxu0 0.0
  %333 = vmatpush1.msra.mxu0 0.0
  %334 = vmatprep.subr.mxu0 0.0
  %335 = vmatpush1.msra.mxu0 0.0
  %336 = vmatprep.subr.mxu0 0.0
  %337 = vmatpush1.msra.mxu0 0.0
  %338 = vmatprep.mubr.f32.mxu0 0.0
  %339 = vmatmul.mubr.f32.gmra.mrb[0].mxu0 %v101
  %v340 = vpop.f32.mrb[0].mxu0
  %v341 = vadd.f32 %v237, %v340
  %v342 = vpop.f32.mrb[0].mxu0
  %v343 = vadd.f32 %v241, %v342
  %344 = vdwg.mxu0
  %345 = vmatprep.subr.mxu0 %v107
  %346 = vmatpush1.msra.mxu0 %v106
  %347 = vmatprep.subr.mxu0 %v115
  %348 = vmatpush1.msra.mxu0 %v114
  %349 = vmatprep.subr.mxu0 %v123
  %350 = vmatpush1.msra.mxu0 %v122
  %351 = vmatprep.subr.mxu0 %v131
  %352 = vmatpush1.msra.mxu0 %v130
  %353 = vmatprep.subr.mxu0 %v139
  %354 = vmatpush1.msra.mxu0 %v138
  %355 = vmatprep.subr.mxu0 %v147
  %356 = vmatpush1.msra.mxu0 %v146
  %357 = vmatprep.subr.mxu0 %v155
  %358 = vmatpush1.msra.mxu0 %v154
  %359 = vmatprep.subr.mxu0 %v163
  %360 = vmatpush1.msra.mxu0 %v162
  %361 = vmatprep.subr.mxu0 %v171
  %362 = vmatpush1.msra.mxu0 %v170
  %363 = vmatprep.subr.mxu0 %v179
  %364 = vmatpush1.msra.mxu0 %v178
  %365 = vmatprep.subr.mxu0 %v187
  %366 = vmatpush1.msra.mxu0 %v186
  %367 = vmatprep.subr.mxu0 %v195
  %368 = vmatpush1.msra.mxu0 %v194
  %369 = vmatprep.subr.mxu0 %v203
  %370 = vmatpush1.msra.mxu0 %v202
  %371 = vmatprep.subr.mxu0 %v211
  %372 = vmatpush1.msra.mxu0 %v210
  %373 = vmatprep.subr.mxu0 %v219
  %374 = vmatpush1.msra.mxu0 %v218
  %375 = vmatprep.subr.mxu0 %v227
  %376 = vmatpush1.msra.mxu0 %v226
  %377 = vmatprep.subr.mxu0 0.0
  %378 = vmatpush1.msra.mxu0 0.0
  %379 = vmatprep.subr.mxu0 0.0
  %380 = vmatpush1.msra.mxu0 0.0
  %381 = vmatprep.subr.mxu0 0.0
  %382 = vmatpush1.msra.mxu0 0.0
  %383 = vmatprep.subr.mxu0 0.0
  %384 = vmatpush1.msra.mxu0 0.0
  %385 = vmatprep.subr.mxu0 0.0
  %386 = vmatpush1.msra.mxu0 0.0
  %387 = vmatprep.subr.mxu0 0.0
  %388 = vmatpush1.msra.mxu0 0.0
  %389 = vmatprep.subr.mxu0 0.0
  %390 = vmatpush1.msra.mxu0 0.0
  %391 = vmatprep.subr.mxu0 0.0
  %392 = vmatpush1.msra.mxu0 0.0
  %393 = vmatprep.subr.mxu0 0.0
  %394 = vmatpush1.msra.mxu0 0.0
  %395 = vmatprep.subr.mxu0 0.0
  %396 = vmatpush1.msra.mxu0 0.0
  %397 = vmatprep.subr.mxu0 0.0
  %398 = vmatpush1.msra.mxu0 0.0
  %399 = vmatprep.subr.mxu0 0.0
  %400 = vmatpush1.msra.mxu0 0.0
  %401 = vmatprep.subr.mxu0 0.0
  %402 = vmatpush1.msra.mxu0 0.0
  %403 = vmatprep.subr.mxu0 0.0
  %404 = vmatpush1.msra.mxu0 0.0
  %405 = vmatprep.subr.mxu0 0.0
  %406 = vmatpush1.msra.mxu0 0.0
  %407 = vmatprep.subr.mxu0 0.0
  %408 = vmatpush1.msra.mxu0 0.0
  %409 = vmatprep.mubr.f32.mxu0 0.0
  %410 = vmatmul.mubr.f32.gmra.mrb[0].mxu0 %v101
  %v411 = vpop.f32.mrb[0].mxu0
  %v412 = vadd.f32 %v245, %v411
  %v413 = vpop.f32.mrb[0].mxu0
  %v414 = vadd.f32 %v249, %v413
  %415 = vdwg.mxu0
  %416 = vmatprep.subr.mxu0 %v109
  %417 = vmatpush1.msra.mxu0 %v108
  %418 = vmatprep.subr.mxu0 %v117
  %419 = vmatpush1.msra.mxu0 %v116
  %420 = vmatprep.subr.mxu0 %v125
  %421 = vmatpush1.msra.mxu0 %v124
  %422 = vmatprep.subr.mxu0 %v133
  %423 = vmatpush1.msra.mxu0 %v132
  %424 = vmatprep.subr.mxu0 %v141
  %425 = vmatpush1.msra.mxu0 %v140
  %426 = vmatprep.subr.mxu0 %v149
  %427 = vmatpush1.msra.mxu0 %v148
  %428 = vmatprep.subr.mxu0 %v157
  %429 = vmatpush1.msra.mxu0 %v156
  %430 = vmatprep.subr.mxu0 %v165
  %431 = vmatpush1.msra.mxu0 %v164
  %432 = vmatprep.subr.mxu0 %v173
  %433 = vmatpush1.msra.mxu0 %v172
  %434 = vmatprep.subr.mxu0 %v181
  %435 = vmatpush1.msra.mxu0 %v180
  %436 = vmatprep.subr.mxu0 %v189
  %437 = vmatpush1.msra.mxu0 %v188
  %438 = vmatprep.subr.mxu0 %v197
  %439 = vmatpush1.msra.mxu0 %v196
  %440 = vmatprep.subr.mxu0 %v205
  %441 = vmatpush1.msra.mxu0 %v204
  %442 = vmatprep.subr.mxu0 %v213
  %443 = vmatpush1.msra.mxu0 %v212
  %444 = vmatprep.subr.mxu0 %v221
  %445 = vmatpush1.msra.mxu0 %v220
  %446 = vmatprep.subr.mxu0 %v229
  %447 = vmatpush1.msra.mxu0 %v228
  %448 = vmatprep.subr.mxu0 0.0
  %449 = vmatpush1.msra.mxu0 0.0
  %450 = vmatprep.subr.mxu0 0.0
  %451 = vmatpush1.msra.mxu0 0.0
  %452 = vmatprep.subr.mxu0 0.0
  %453 = vmatpush1.msra.mxu0 0.0
  %454 = vmatprep.subr.mxu0 0.0
  %455 = vmatpush1.msra.mxu0 0.0
  %456 = vmatprep.subr.mxu0 0.0
  %457 = vmatpush1.msra.mxu0 0.0
  %458 = vmatprep.subr.mxu0 0.0
  %459 = vmatpush1.msra.mxu0 0.0
  %460 = vmatprep.subr.mxu0 0.0
  %461 = vmatpush1.msra.mxu0 0.0
  %462 = vmatprep.subr.mxu0 0.0
  %463 = vmatpush1.msra.mxu0 0.0
  %464 = vmatprep.subr.mxu0 0.0
  %465 = vmatpush1.msra.mxu0 0.0
  %466 = vmatprep.subr.mxu0 0.0
  %467 = vmatpush1.msra.mxu0 0.0
  %468 = vmatprep.subr.mxu0 0.0
  %469 = vmatpush1.msra.mxu0 0.0
  %470 = vmatprep.subr.mxu0 0.0
  %471 = vmatpush1.msra.mxu0 0.0
  %472 = vmatprep.subr.mxu0 0.0
  %473 = vmatpush1.msra.mxu0 0.0
  %474 = vmatprep.subr.mxu0 0.0
  %475 = vmatpush1.msra.mxu0 0.0
  %476 = vmatprep.subr.mxu0 0.0
  %477 = vmatpush1.msra.mxu0 0.0
  %478 = vmatprep.subr.mxu0 0.0
  %479 = vmatpush1.msra.mxu0 0.0
  %480 = vmatprep.mubr.f32.mxu0 0.0
  %481 = vmatmul.mubr.f32.gmra.mrb[0].mxu0 %v101
  %v482 = vpop.f32.mrb[0].mxu0
  %v483 = vadd.f32 %v253, %v482
  %v484 = vpop.f32.mrb[0].mxu0
  %v485 = vadd.f32 %v257, %v484
  %486 = vdwg.mxu0
  %487 = vmatprep.subr.mxu0 %v111
  %488 = vmatpush1.msra.mxu0 %v110
  %489 = vmatprep.subr.mxu0 %v119
  %490 = vmatpush1.msra.mxu0 %v118
  %491 = vmatprep.subr.mxu0 %v127
  %492 = vmatpush1.msra.mxu0 %v126
  %493 = vmatprep.subr.mxu0 %v135
  %494 = vmatpush1.msra.mxu0 %v134
  %495 = vmatprep.subr.mxu0 %v143
  %496 = vmatpush1.msra.mxu0 %v142
  %497 = vmatprep.subr.mxu0 %v151
  %498 = vmatpush1.msra.mxu0 %v150
  %499 = vmatprep.subr.mxu0 %v159
  %500 = vmatpush1.msra.mxu0 %v158
  %501 = vmatprep.subr.mxu0 %v167
  %502 = vmatpush1.msra.mxu0 %v166
  %503 = vmatprep.subr.mxu0 %v175
  %504 = vmatpush1.msra.mxu0 %v174
  %505 = vmatprep.subr.mxu0 %v183
  %506 = vmatpush1.msra.mxu0 %v182
  %507 = vmatprep.subr.mxu0 %v191
  %508 = vmatpush1.msra.mxu0 %v190
  %509 = vmatprep.subr.mxu0 %v199
  %510 = vmatpush1.msra.mxu0 %v198
  %511 = vmatprep.subr.mxu0 %v207
  %512 = vmatpush1.msra.mxu0 %v206
  %513 = vmatprep.subr.mxu0 %v215
  %514 = vmatpush1.msra.mxu0 %v214
  %515 = vmatprep.subr.mxu0 %v223
  %516 = vmatpush1.msra.mxu0 %v222
  %517 = vmatprep.subr.mxu0 %v231
  %518 = vmatpush1.msra.mxu0 %v230
  %519 = vmatprep.subr.mxu0 0.0
  %520 = vmatpush1.msra.mxu0 0.0
  %521 = vmatprep.subr.mxu0 0.0
  %522 = vmatpush1.msra.mxu0 0.0
  %523 = vmatprep.subr.mxu0 0.0
  %524 = vmatpush1.msra.mxu0 0.0
  %525 = vmatprep.subr.mxu0 0.0
  %526 = vmatpush1.msra.mxu0 0.0
  %527 = vmatprep.subr.mxu0 0.0
  %528 = vmatpush1.msra.mxu0 0.0
  %529 = vmatprep.subr.mxu0 0.0
  %530 = vmatpush1.msra.mxu0 0.0
  %531 = vmatprep.subr.mxu0 0.0
  %532 = vmatpush1.msra.mxu0 0.0
  %533 = vmatprep.subr.mxu0 0.0
  %534 = vmatpush1.msra.mxu0 0.0
  %535 = vmatprep.subr.mxu0 0.0
  %536 = vmatpush1.msra.mxu0 0.0
  %537 = vmatprep.subr.mxu0 0.0
  %538 = vmatpush1.msra.mxu0 0.0
  %539 = vmatprep.subr.mxu0 0.0
  %540 = vmatpush1.msra.mxu0 0.0
  %541 = vmatprep.subr.mxu0 0.0
  %542 = vmatpush1.msra.mxu0 0.0
  %543 = vmatprep.subr.mxu0 0.0
  %544 = vmatpush1.msra.mxu0 0.0
  %545 = vmatprep.subr.mxu0 0.0
  %546 = vmatpush1.msra.mxu0 0.0
  %547 = vmatprep.subr.mxu0 0.0
  %548 = vmatpush1.msra.mxu0 0.0
  %549 = vmatprep.subr.mxu0 0.0
  %550 = vmatpush1.msra.mxu0 0.0
  %551 = vmatprep.mubr.f32.mxu0 0.0
  %552 = vmatmul.mubr.f32.gmra.mrb[0].mxu0 %v101
  %v553 = vpop.f32.mrb[0].mxu0
  %v554 = vadd.f32 %v261, %v553
  %v555 = vpop.f32.mrb[0].mxu0
  %v556 = vadd.f32 %v265, %v555
  %557 = vdwg.mxu0
  %v558 = vmax.f32 %v341, 0.0
  %v559 = vmax.f32 %v343, 0.0
  %v560 = vmax.f32 %v412, 0.0
  %v561 = vmax.f32 %v414, 0.0
  %v562 = vmax.f32 %v483, 0.0
  %v563 = vmax.f32 %v485, 0.0
  %v564 = vmax.f32 %v554, 0.0
  %v565 = vmax.f32 %v556, 0.0
  %566 = vst [vmem:[%s4] sm:$0xff] %v558
  %567 = vst [vmem:[%s4 + $0x8] sm:$0xff] %v559
  %568 = vst [vmem:[%s4 + $0x10] sm:$0xff] %v560
  %569 = vst [vmem:[%s4 + $0x18] sm:$0xff] %v561
  %570 = vst [vmem:[%s4 + $0x20] sm:$0xff] %v562
  %571 = vst [vmem:[%s4 + $0x28] sm:$0xff] %v563
  %572 = vst [vmem:[%s4 + $0x30] sm:$0xff] %v564
  %573 = vst [vmem:[%s4 + $0x38] sm:$0xff] %v565
  // Predicated region
  $region18: #{line_agc.1} parent=0 // pred_check
    _
  $region19: #{line_agc.1} parent=0 // pred_check_branch
    %575 = sbr.rel (0) target = $region21
  $region20: #{line_agc.1} parent=0 // pred_region
    _
  $region21: #{line_agc.1} parent=0 // pred_fallthru
    _
  // Predicated region
  $region22: #{line_agc.1} parent=0 // pred_check
    _
  $region23: #{line_agc.1} parent=0 // pred_check_branch
    %577 = sbr.rel (0) target = $region25
  $region24: #{line_agc.1} parent=0 // pred_region
    _
  $region25: #{line_agc.1} parent=0 // pred_fallthru
    _

</llo_original>
